<compile_context>
chip_gen: v7x
topology: tpu7x:2x2x1
jax: 0.10.0
libtpu: 0.0.40
codegen_flags: <defaults>
</compile_context>

<pallas_src>
import jax
import jax.numpy as jnp
import numpy as np
from jax.experimental import pallas as pl
from jax.experimental.pallas import tpu as pltpu

# torch.nan_to_num(-inf) for float32; plain numpy scalar so the kernel never
# captures a traced constant.
_F32_MIN = np.float32(np.finfo(np.float32).min)


# ---------------------------------------------------------------------------
# Kernel
# ---------------------------------------------------------------------------
def _attention_weights(x, mask, w1, b1, w2):
    """Scores -> masked, numerically-stable softmax.  All softmax math in f32."""
    bt, S, D = x.shape
    H = w1.shape[1]
    # Linear(D->H) + tanh: one (bt*S, D) @ (D, H) MXU matmul, f32 accumulation.
    h = jnp.tanh(
        jnp.dot(x.reshape(bt * S, D), w1, preferred_element_type=jnp.float32)
        + b1                                             # (1, H) broadcast
    )                                                    # (bt*S, H) f32
    # Linear(H->1, bias=False) as VPU multiply + lane reduction (MXU stays free).
    scores = jnp.sum(h.reshape(bt, S, H) * w2, axis=-1)  # (bt, S) f32
    # torch.nan_to_num(-inf * mask): add float32.min where mask == 1.
    scores = scores + jnp.where(mask > 0.0, _F32_MIN, np.float32(0.0))
    # Stable softmax over the lane-dense sequence axis.
    m = jnp.max(scores, axis=-1, keepdims=True)
    e = jnp.exp(scores - m)
    denom = jnp.sum(e, axis=-1, keepdims=True)
    # softmax * (~mask) fused into a single select.
    return jnp.where(mask > 0.0, np.float32(0.0),
                     e * pl.reciprocal(denom, approx=False))     # (bt, S) f32


def _make_kernel(write_outputs, f32_elementwise):
    def kernel(x_ref, mask_ref, w1_ref, b1_ref, w2_ref, *out_refs):
        if write_outputs:
            wsum_ref, out_ref, wts_ref = out_refs
        else:
            wsum_ref, wts_ref = out_refs

        bt, S, D = x_ref.shape
        x = x_ref[...]                       # native dtype -> matched MXU operands
        mask = mask_ref[...]                 # (bt, S) f32, 1.0 == padded

        w = _attention_weights(x, mask, w1_ref[...], b1_ref[...], w2_ref[...])
        wts_ref[...] = w.astype(wts_ref.dtype)           # lane-dense store

        if f32_elementwise:
            # f32 inputs, or chips without a bf16 VALU (v5e): f32 VPU path.
            out = x.astype(jnp.float32) * w.reshape(bt, S, 1)
            if write_outputs:
                out_ref[...] = out.astype(out_ref.dtype)
            wsum_ref[...] = jnp.sum(out, axis=1).astype(wsum_ref.dtype)
        else:
            # bf16 inputs on v6e/v7x: keep the (bt,S,D) product in bf16 (halves
            # the largest intermediate) and accumulate the weighted sum in f32
            # on the MXU instead of materializing an f32 (bt,S,D) tensor.
            w_n = w.astype(x.dtype)
            if write_outputs:
                out_ref[...] = (x * w_n.reshape(bt, S, 1)).astype(out_ref.dtype)
            wsum = jnp.einsum('bqs,bsd->bqd', w_n.reshape(bt, 1, S), x,
                              preferred_element_type=jnp.float32)
            wsum_ref[...] = wsum.reshape(bt, D).astype(wsum_ref.dtype)

    return kernel


# ---------------------------------------------------------------------------
# Block sizing
# ---------------------------------------------------------------------------
def _generation_params():
    """Per-generation VMEM budgets and bf16-VALU availability."""
    try:
        kind = jax.devices()[0].device_kind.lower()
    except Exception:  # pragma: no cover - defensive
        kind = ""
    if "v5" in kind or "v6" in kind:
        # v5e/v6e: 128 MiB physical VMEM per TensorCore -> large blocks.
        # v5e has no bf16 VALU, so keep elementwise math in f32 there.
        return {"budget": 44 << 20, "vmem_limit": 96 << 20,
                "bf16_valu": "v6" in kind}
    # v7x (64 MiB VMEM per TC, 2 TCs) and unknown chips: leave headroom for
    # Mosaic internal scratch.
    return {"budget": 26 << 20, "vmem_limit": 48 << 20, "bf16_valu": True}


def _pick_block_b(S, D, Hp, itemsize, write_outputs, f32_elementwise, budget):
    """Largest 8-aligned batch block with ~2048 MXU rows that fits the budget."""
    target_rows = 2048
    bt = ((max(8, -(-target_rows // S)) + 7) // 8) * 8

    def vmem_bytes(b):
        db = 2                                            # double buffering
        total = db * b * S * D * itemsize                 # x in
        if write_outputs:
            total += db * b * S * D * itemsize            # outputs out
        total += db * b * D * itemsize                    # wsum out
        total += db * b * S * itemsize                    # weights out
        total += db * b * S * 4                           # mask in (f32)
        total += db * (D * Hp * itemsize + 2 * Hp * 4)    # W1 / b1 / w2
        total += b * S * Hp * 4                           # h intermediate (f32)
        total += 4 * b * S * 4                            # scores/exp/weights temps
        total += b * S * D * (4 if f32_elementwise else itemsize)  # product temp
        return total

    while bt > 8 and vmem_bytes(bt) > budget:
        bt -= 8
    return bt


def _legalize_block_b(bt, B):
    bt = max(8, (bt // 8) * 8)
    if bt >= B:
        if B < 16:
            return B                     # single full-batch block (full dim is legal)
        # Whole batch would fit one block: split so the grid has >= 2 steps
        # (v7x megacore sharding + prefetch/writeback overlap).
        half = -(-B // 2)
        return ((half + 7) // 8) * 8
    # bt < B: spread rows evenly over the same block count to minimize padding.
    nb = -(-B // bt)
    even = -(-B // nb)
    return min(bt, ((even + 7) // 8) * 8)


# ---------------------------------------------------------------------------
# Wrapper
# ---------------------------------------------------------------------------
def additive_attention(x, w1, b1, w2, padding_mask=None, *, block_b=None,
                       return_outputs=True):
    """x: (B, S, D). w1: (D, H), b1: (H,), w2: (H, 1). padding_mask: (B, S), 1 = pad."""
    B, S, D = x.shape
    H = w1.shape[1]
    dtype = x.dtype

    gen = _generation_params()
    f32_elementwise = not (dtype == jnp.bfloat16 and gen["bf16_valu"])

    # Lane/sublane-friendly padded sizes: S to a multiple of 8 (free reshapes,
    # 8-aligned MXU rows), H to a multiple of 128 (lane-dense hidden tile).
    # Zero-padded W1/b1/w2 columns contribute exactly 0 to the scores.
    Sp = ((S + 7) // 8) * 8
    Hp = ((H + 127) // 128) * 128

    # Mask fed lane-dense as (B, S); mask==0 everywhere reproduces the unmasked
    # path exactly, so we always pass a mask tensor.
    if padding_mask is None:
        mask = jnp.zeros((B, S), jnp.float32)
    else:
        mask = padding_mask.astype(jnp.float32).reshape(B, S)
    if Sp != S:
        x = jnp.pad(x, ((0, 0), (0, Sp - S), (0, 0)))
        mask = jnp.pad(mask, ((0, 0), (0, Sp - S)), constant_values=1.0)

    if block_b is None:
        block_b = _pick_block_b(Sp, D, Hp, dtype.itemsize, return_outputs,
                                f32_elementwise, gen["budget"])
    bt = _legalize_block_b(block_b, B)

    # Pad the batch to a multiple of bt (padded rows: x zeros, mask 0; their
    # results are sliced off below).
    n_blocks = pl.cdiv(B, bt)
    Bp = n_blocks * bt
    if Bp != B:
        x = jnp.pad(x, ((0, Bp - B), (0, 0), (0, 0)))
        mask = jnp.pad(mask, ((0, Bp - B), (0, 0)))

    # Weights: W1 in x.dtype (matched MXU operands for bf16 models); b1/w2 f32.
    w1p = jnp.zeros((D, Hp), dtype).at[:, :H].set(w1.astype(dtype))
    b1p = jnp.zeros((1, Hp), jnp.float32).at[0, :H].set(b1.astype(jnp.float32))
    w2p = jnp.zeros((1, Hp), jnp.float32).at[0, :H].set(
        w2.reshape(H).astype(jnp.float32))

    kernel = _make_kernel(return_outputs, f32_elementwise)

    out_shapes = [jax.ShapeDtypeStruct((Bp, D), dtype)]            # weighted_sum
    out_specs = [pl.BlockSpec((bt, D), lambda b: (b, 0))]
    if return_outputs:
        out_shapes.append(jax.ShapeDtypeStruct((Bp, Sp, D), dtype))  # attention_outputs
        out_specs.append(pl.BlockSpec((bt, Sp, D), lambda b: (b, 0, 0)))
    out_shapes.append(jax.ShapeDtypeStruct((Bp, Sp), dtype))       # attention_weights
    out_specs.append(pl.BlockSpec((bt, Sp), lambda b: (b, 0)))

    results = pl.pallas_call(
        kernel,
        out_shape=tuple(out_shapes),
        grid=(n_blocks,),
        in_specs=[
            pl.BlockSpec((bt, Sp, D), lambda b: (b, 0, 0)),  # x
            pl.BlockSpec((bt, Sp), lambda b: (b, 0)),         # mask (lane-dense)
            pl.BlockSpec((D, Hp), lambda b: (0, 0)),          # W1 (x.dtype)
            pl.BlockSpec((1, Hp), lambda b: (0, 0)),          # b1 row (f32)
            pl.BlockSpec((1, Hp), lambda b: (0, 0)),          # w2 row (f32)
        ],
        # TODO(synk): if xprof shows exposed DMA with the larger blocks, add
        # pipeline_mode=pl.Buffered(3) on the x in_spec / outputs out_spec.
        out_specs=tuple(out_specs),
        compiler_params=pltpu.CompilerParams(
            dimension_semantics=("parallel",),       # megacore-shardable on v7x
            vmem_limit_bytes=gen["vmem_limit"],
        ),
    )(x, mask, w1p, b1p, w2p)

    if return_outputs:
        wsum, outs, wts = results
        return wsum[:B], outs[:B, :S], wts[:B, :S, None]
    wsum, wts = results
    return wsum[:B], None, wts[:B, :S, None]


# ---------------------------------------------------------------------------
# Reference + test
# ---------------------------------------------------------------------------
def _reference(x, w1, b1, w2, padding_mask=None):
    """Pure-JAX reference mirroring the PyTorch forward."""
    scores = jnp.tanh(x @ w1 + b1) @ w2                      # (B, S, 1)
    if padding_mask is not None:
        mask_vals = jnp.where(padding_mask > 0, _F32_MIN, 0.0)[:, :, None]
        scores = scores + mask_vals
        weights = jax.nn.softmax(scores, axis=-2)
        weights = weights * (1.0 - padding_mask.astype(jnp.float32))[:, :, None]
    else:
        weights = jax.nn.softmax(scores, axis=-2)
    outputs = x * weights
    return jnp.sum(outputs, axis=1), outputs, weights


def xavier_uniform(key, shape, dtype=jnp.float32):
    fan_in, fan_out = shape[0], shape[1]
    limit = float(np.sqrt(6.0 / (fan_in + fan_out)))
    return jax.random.uniform(key, shape, dtype, minval=-limit, maxval=limit)


def _check(got, want, name):
    for g, w, n in zip(got, want, ("wsum", "outputs", "weights")):
        assert jnp.allclose(g, w, rtol=1e-5, atol=1e-5), f"{name}:{n} mismatch"


if __name__ == "__main__":
    key = jax.random.PRNGKey(0)
    k_x, k_w1, k_w2, k_x2, k_m2 = jax.random.split(key, 5)

    B, S, D, H = 2, 8, 32, 16
    x = jax.random.normal(k_x, (B, S, D), jnp.float32)
    w1 = xavier_uniform(k_w1, (D, H))          # Linear(D, H).weight.T
    b1 = jnp.zeros((H,), jnp.float32)
    w2 = xavier_uniform(k_w2, (H, 1))          # Linear(H, 1, bias=False).weight.T

    padding_mask = jnp.zeros((B, S), jnp.int32).at[1, 5:].set(1)

    # Masked path.
    res = additive_attention(x, w1, b1, w2, padding_mask)
    jax.block_until_ready(res)
    _check(res, _reference(x, w1, b1, w2, padding_mask), "masked")

    # Unmasked path (padding_mask=None).
    res_n = additive_attention(x, w1, b1, w2, None)
    jax.block_until_ready(res_n)
    _check(res_n, _reference(x, w1, b1, w2, None), "unmasked")

    # Multi-block path: B not divisible by the block size exercises batch
    # padding, a grid of length > 1 and a fully-padded row.
    B2 = 10
    x2 = jax.random.normal(k_x2, (B2, S, D), jnp.float32)
    mask2 = (jax.random.uniform(k_m2, (B2, S)) < 0.25).astype(jnp.int32)
    mask2 = mask2.at[3].set(1)                 # fully padded row
    res2 = additive_attention(x2, w1, b1, w2, mask2, block_b=8)
    jax.block_until_ready(res2)
    ref2 = _reference(x2, w1, b1, w2, mask2)
    _check(res2, ref2, "multiblock")

    # wsum-only path (skips the (B,S,D) outputs store; ~half the HBM traffic).
    wsum_only, none_out, wts_only = additive_attention(
        x2, w1, b1, w2, mask2, block_b=8, return_outputs=False)
    jax.block_until_ready((wsum_only, wts_only))
    assert none_out is None
    assert jnp.allclose(wsum_only, ref2[0], rtol=1e-5, atol=1e-5), "wsum-only mismatch"
    assert jnp.allclose(wts_only, ref2[2], rtol=1e-5, atol=1e-5), "wts-only mismatch"

    print("KERNEL_OK")
</pallas_src>

<mosaic_0001>
module attributes {stable_mosaic.version = 11 : i64} {
  func.func @kernel(%arg0: i32, %arg1: memref<2x8x32xf32, #tpu.memory_space<vmem>>, %arg2: memref<2x8xf32, #tpu.memory_space<vmem>>, %arg3: memref<32x128xf32, #tpu.memory_space<vmem>>, %arg4: memref<1x128xf32, #tpu.memory_space<vmem>>, %arg5: memref<1x128xf32, #tpu.memory_space<vmem>>, %arg6: memref<2x32xf32, #tpu.memory_space<vmem>>, %arg7: memref<2x8x32xf32, #tpu.memory_space<vmem>>, %arg8: memref<2x8xf32, #tpu.memory_space<vmem>>) attributes {dimension_semantics = [#tpu.dimension_semantics<parallel>], iteration_bounds = array<i64: 1>, scalar_prefetch = 0 : i64, scratch_operands = 0 : i64, tpu.core_type = #tpu.core_type<tc>, window_params = [{transform_indices = @transform_0, window_bounds = array<i64: 2, 8, 32>}, {transform_indices = @transform_1, window_bounds = array<i64: 2, 8>}, {pipeline_mode = #tpu.pipeline_mode<synchronous>, transform_indices = @transform_2, window_bounds = array<i64: 32, 128>}, {pipeline_mode = #tpu.pipeline_mode<synchronous>, transform_indices = @transform_3, window_bounds = array<i64: 1, 128>}, {pipeline_mode = #tpu.pipeline_mode<synchronous>, transform_indices = @transform_4, window_bounds = array<i64: 1, 128>}, {transform_indices = @transform_5, window_bounds = array<i64: 2, 32>}, {transform_indices = @transform_6, window_bounds = array<i64: 2, 8, 32>}, {transform_indices = @transform_7, window_bounds = array<i64: 2, 8>}]} {
    %c0 = arith.constant 0 : index
    %c0_0 = arith.constant 0 : index
    %c0_1 = arith.constant 0 : index
    %0 = vector.load %arg1[%c0, %c0_0, %c0_1] : memref<2x8x32xf32, #tpu.memory_space<vmem>>, vector<2x8x32xf32>
    %c0_2 = arith.constant 0 : index
    %c0_3 = arith.constant 0 : index
    %1 = vector.load %arg2[%c0_2, %c0_3] : memref<2x8xf32, #tpu.memory_space<vmem>>, vector<2x8xf32>
    %c0_4 = arith.constant 0 : index
    %c0_5 = arith.constant 0 : index
    %2 = vector.load %arg3[%c0_4, %c0_5] : memref<32x128xf32, #tpu.memory_space<vmem>>, vector<32x128xf32>
    %c0_6 = arith.constant 0 : index
    %c0_7 = arith.constant 0 : index
    %3 = vector.load %arg4[%c0_6, %c0_7] : memref<1x128xf32, #tpu.memory_space<vmem>>, vector<1x128xf32>
    %c0_8 = arith.constant 0 : index
    %c0_9 = arith.constant 0 : index
    %4 = vector.load %arg5[%c0_8, %c0_9] : memref<1x128xf32, #tpu.memory_space<vmem>>, vector<1x128xf32>
    %5 = vector.shape_cast %0 : vector<2x8x32xf32> to vector<16x32xf32>
    %cst = arith.constant dense<0.000000e+00> : vector<16x128xf32>
    %6 = tpu.matmul %5, %2, %cst {dimension_numbers = #tpu.dot_dimension_numbers<[1], [0], [0], [1], [0, 0, 1, 1], [], []>} : vector<16x32xf32>, vector<32x128xf32>, vector<16x128xf32> -> vector<16x128xf32>
    %7 = vector.broadcast %3 : vector<1x128xf32> to vector<16x128xf32>
    %8 = arith.addf %6, %7 : vector<16x128xf32>
    %9 = math.tanh %8 : vector<16x128xf32>
    %10 = vector.shape_cast %9 : vector<16x128xf32> to vector<2x8x128xf32>
    %11 = vector.shape_cast %4 : vector<1x128xf32> to vector<1x1x128xf32>
    %12 = vector.broadcast %11 : vector<1x1x128xf32> to vector<2x8x128xf32>
    %13 = arith.mulf %10, %12 : vector<2x8x128xf32>
    %cst_10 = arith.constant dense<0.000000e+00> : vector<2x8xf32>
    %14 = vector.multi_reduction <add>, %13, %cst_10 [2] : vector<2x8x128xf32> to vector<2x8xf32>
    %cst_11 = arith.constant 0.000000e+00 : f32
    %15 = vector.broadcast %cst_11 : f32 to vector<2x8xf32>
    %16 = arith.cmpf ogt, %1, %15 : vector<2x8xf32>
    %cst_12 = arith.constant -3.40282347E+38 : f32
    %cst_13 = arith.constant 0.000000e+00 : f32
    %17 = vector.broadcast %cst_12 : f32 to vector<2x8xf32>
    %18 = vector.broadcast %cst_13 : f32 to vector<2x8xf32>
    %19 = arith.select %16, %17, %18 : vector<2x8xi1>, vector<2x8xf32>
    %20 = arith.addf %14, %19 : vector<2x8xf32>
    %cst_14 = arith.constant dense<0xFF800000> : vector<2xf32>
    %21 = vector.multi_reduction <maximumf>, %20, %cst_14 [1] : vector<2x8xf32> to vector<2xf32>
    %22 = vector.shape_cast %21 : vector<2xf32> to vector<2x1xf32>
    %23 = vector.broadcast %22 : vector<2x1xf32> to vector<2x8xf32>
    %24 = arith.subf %20, %23 : vector<2x8xf32>
    %25 = math.exp %24 : vector<2x8xf32>
    %cst_15 = arith.constant dense<0.000000e+00> : vector<2xf32>
    %26 = vector.multi_reduction <add>, %25, %cst_15 [1] : vector<2x8xf32> to vector<2xf32>
    %27 = vector.shape_cast %26 : vector<2xf32> to vector<2x1xf32>
    %cst_16 = arith.constant 0.000000e+00 : f32
    %28 = vector.broadcast %cst_16 : f32 to vector<2x8xf32>
    %29 = arith.cmpf ogt, %1, %28 : vector<2x8xf32>
    %30 = tpu.reciprocal %27 : vector<2x1xf32> -> vector<2x1xf32>
    %31 = vector.broadcast %30 : vector<2x1xf32> to vector<2x8xf32>
    %32 = arith.mulf %25, %31 : vector<2x8xf32>
    %cst_17 = arith.constant 0.000000e+00 : f32
    %33 = vector.broadcast %cst_17 : f32 to vector<2x8xf32>
    %34 = arith.select %29, %33, %32 : vector<2x8xi1>, vector<2x8xf32>
    %c0_18 = arith.constant 0 : index
    %c0_19 = arith.constant 0 : index
    %35 = vector.load %arg8[%c0_18, %c0_19] : memref<2x8xf32, #tpu.memory_space<vmem>>, vector<2x8xf32>
    tpu.vector_store %arg8[%c0_18, %c0_19], %34 {strides = array<i32>} : memref<2x8xf32, #tpu.memory_space<vmem>>, vector<2x8xf32>,
    %36 = vector.shape_cast %34 : vector<2x8xf32> to vector<2x8x1xf32>
    %37 = vector.broadcast %36 : vector<2x8x1xf32> to vector<2x8x32xf32>
    %38 = arith.mulf %0, %37 : vector<2x8x32xf32>
    %c0_20 = arith.constant 0 : index
    %c0_21 = arith.constant 0 : index
    %c0_22 = arith.constant 0 : index
    %39 = vector.load %arg7[%c0_20, %c0_21, %c0_22] : memref<2x8x32xf32, #tpu.memory_space<vmem>>, vector<2x8x32xf32>
    tpu.vector_store %arg7[%c0_20, %c0_21, %c0_22], %38 {strides = array<i32>} : memref<2x8x32xf32, #tpu.memory_space<vmem>>, vector<2x8x32xf32>,
    %cst_23 = arith.constant dense<0.000000e+00> : vector<2x32xf32>
    %40 = vector.multi_reduction <add>, %38, %cst_23 [1] : vector<2x8x32xf32> to vector<2x32xf32>
    %c0_24 = arith.constant 0 : index
    %c0_25 = arith.constant 0 : index
    %41 = vector.load %arg6[%c0_24, %c0_25] : memref<2x32xf32, #tpu.memory_space<vmem>>, vector<2x32xf32>
    tpu.vector_store %arg6[%c0_24, %c0_25], %40 {strides = array<i32>} : memref<2x32xf32, #tpu.memory_space<vmem>>, vector<2x32xf32>,
    return
  }
  func.func @transform_0(%arg0: i32) -> (i32, i32, i32) {
    %c0_i32 = arith.constant 0 : i32
    %c0_i32_0 = arith.constant 0 : i32
    %c0_i32_1 = arith.constant 0 : i32
    return %arg0, %c0_i32, %c0_i32_0 : i32, i32, i32
  }
  func.func @transform_1(%arg0: i32) -> (i32, i32) {
    %c0_i32 = arith.constant 0 : i32
    %c0_i32_0 = arith.constant 0 : i32
    return %arg0, %c0_i32 : i32, i32
  }
  func.func @transform_2(%arg0: i32) -> (i32, i32) {
    %c0_i32 = arith.constant 0 : i32
    %c0_i32_0 = arith.constant 0 : i32
    %c0_i32_1 = arith.constant 0 : i32
    return %c0_i32, %c0_i32_0 : i32, i32
  }
  func.func @transform_3(%arg0: i32) -> (i32, i32) {
    %c0_i32 = arith.constant 0 : i32
    %c0_i32_0 = arith.constant 0 : i32
    %c0_i32_1 = arith.constant 0 : i32
    return %c0_i32, %c0_i32_0 : i32, i32
  }
  func.func @transform_4(%arg0: i32) -> (i32, i32) {
    %c0_i32 = arith.constant 0 : i32
    %c0_i32_0 = arith.constant 0 : i32
    %c0_i32_1 = arith.constant 0 : i32
    return %c0_i32, %c0_i32_0 : i32, i32
  }
  func.func @transform_5(%arg0: i32) -> (i32, i32) {
    %c0_i32 = arith.constant 0 : i32
    %c0_i32_0 = arith.constant 0 : i32
    return %arg0, %c0_i32 : i32, i32
  }
  func.func @transform_6(%arg0: i32) -> (i32, i32, i32) {
    %c0_i32 = arith.constant 0 : i32
    %c0_i32_0 = arith.constant 0 : i32
    %c0_i32_1 = arith.constant 0 : i32
    return %arg0, %c0_i32, %c0_i32_0 : i32, i32, i32
  }
  func.func @transform_7(%arg0: i32) -> (i32, i32) {
    %c0_i32 = arith.constant 0 : i32
    %c0_i32_0 = arith.constant 0 : i32
    return %arg0, %c0_i32 : i32, i32
  }
}

</mosaic_0001>

<llo_original>
// kernel: tpu_custom_call.1
$region0: #{tpu_custom_call.1}
  #allocation0 [shape = 'u32[]', space=smem, size = 0x4, offset = 0x4, fixed_abs, tag = 'smem constant byte address 0x4 - core index']
  #allocation1 [shape = 'u32[144,128]{1,0:T(1,128)}', space=vmem, size = 0x12000, scoped, tag = 'internal scratch']
  %s0 = inlined_call_operand.hbm [shape: f32[2,8,32], index: 0, kind: input, shape index: {}]
  %s1 = inlined_call_operand.vmem [shape: f32[2,8], index: 1, kind: input, shape index: {}]
  %s2 = inlined_call_operand.hbm [shape: f32[32,128], index: 2, kind: input, shape index: {}]
  %s3 = inlined_call_operand.vmem [shape: f32[1,128], index: 3, kind: input, shape index: {}]
  %s4 = inlined_call_operand.vmem [shape: f32[1,128], index: 4, kind: input, shape index: {}]
  %s5 = inlined_call_operand.hbm [shape: f32[2,32], index: 5, kind: output, shape index: {0}]
  %s6 = inlined_call_operand.hbm [shape: f32[2,8,32], index: 6, kind: output, shape index: {1}]
  %s7 = inlined_call_operand.hbm [shape: f32[2,8], index: 7, kind: output, shape index: {2}]
  %8 = xla_tuple %s5, %s6, %s7
  %s9 = sld [smem:[#allocation0]]
  $region54: #{tpu_custom_call.1} parent=0
    _
  %s11 = ssub.s32 1, %s9
  %s12 = scalar_select 0, %s11, %s9
  $region1: #{tpu_custom_call.1} parent=0
    #allocation2 [shape = 'u8[8192]{0}', space=vmem, size = 0x2000, scoped, tag = 'input window, operand 0, single buffered']
    #allocation3 [shape = 's32[1]{0}', space=sflag, size = 0x4, scoped, tag = 'scoped memory for tpu_custom_call.1']
    #allocation4 [shape = 's32[1]{0}', space=sflag, size = 0x4, scoped, tag = 'scoped memory for tpu_custom_call.1']
    #allocation5 [shape = 'u8[16384]{0}', space=vmem, size = 0x4000, scoped, tag = 'input window, operand 2, single buffered']
    #allocation6 [shape = 's32[1]{0}', space=sflag, size = 0x4, scoped, tag = 'scoped memory for tpu_custom_call.1']
    #allocation7 [shape = 'u8[1024]{0}', space=vmem, size = 0x400, scoped, tag = 'output window, operand 0, single buffered']
    #allocation8 [shape = 'u8[8192]{0}', space=vmem, size = 0x2000, scoped, tag = 'output window, operand 1, single buffered']
    #allocation9 [shape = 's32[1]{0}', space=sflag, size = 0x4, scoped, tag = 'scoped memory for tpu_custom_call.1']
    #allocation10 [shape = 'u8[1024]{0}', space=vmem, size = 0x400, scoped, tag = 'output window, operand 2, single buffered']
    %13 = vsyncpa [#allocation3], 0
    %14 = vsyncpa [#allocation6], 0
    %15 = vsyncpa [#allocation4], 0
    %16 = vsyncpa [#allocation9], 0
    // Predicated region
    $region2: #{tpu_custom_call.1} parent=1 // pred_check
      _
    $region3: #{tpu_custom_call.1} parent=1 // pred_check_branch
      %18 = sbr.rel (0) target = $region5
    $region4: #{tpu_custom_call.1} parent=1 // pred_region
      %s20 = ssub.s32 256, 256
      %21 = vsyncadd [#allocation3], %s20
      %s22 = sshll.u32 [#allocation2], 4
      %s23 = int_to_ptr.vmem [resolvable:$true] %s22
      %28 = dma.hbm_to_vmem [thread:$0]  %s0, 256, %s23, [#allocation3], 128, 128, 8
    $region5: #{tpu_custom_call.1} parent=1 // pred_fallthru
      _
    // Predicated region
    $region6: #{tpu_custom_call.1} parent=1 // pred_check
      _
    $region7: #{tpu_custom_call.1} parent=1 // pred_check_branch
      %30 = sbr.rel (0) target = $region9
    $region8: #{tpu_custom_call.1} parent=1 // pred_region
      _
    $region9: #{tpu_custom_call.1} parent=1 // pred_fallthru
      _
    // Predicated region
    $region10: #{tpu_custom_call.1} parent=1 // pred_check
      _
    $region11: #{tpu_custom_call.1} parent=1 // pred_check_branch
      %32 = sbr.rel (0) target = $region13
    $region12: #{tpu_custom_call.1} parent=1 // pred_region
      %s34 = ssub.s32 512, 512
      %35 = vsyncadd [#allocation6], %s34
      %s36 = sshll.u32 [#allocation5], 4
      %s37 = int_to_ptr.vmem [resolvable:$true] %s36
      %42 = dma.hbm_to_vmem [thread:$0]  %s2, 512, %s37, [#allocation6], 128, 128, 8
    $region13: #{tpu_custom_call.1} parent=1 // pred_fallthru
      _
    // Predicated region
    $region14: #{tpu_custom_call.1} parent=1 // pred_check
      _
    $region15: #{tpu_custom_call.1} parent=1 // pred_check_branch
      %44 = sbr.rel (0) target = $region17
    $region16: #{tpu_custom_call.1} parent=1 // pred_region
      _
    $region17: #{tpu_custom_call.1} parent=1 // pred_fallthru
      _
    // Predicated region
    $region18: #{tpu_custom_call.1} parent=1 // pred_check
      _
    $region19: #{tpu_custom_call.1} parent=1 // pred_check_branch
      %46 = sbr.rel (0) target = $region21
    $region20: #{tpu_custom_call.1} parent=1 // pred_region
      _
    $region21: #{tpu_custom_call.1} parent=1 // pred_fallthru
      _
    // Predicated region
    $region22: #{tpu_custom_call.1} parent=1 // pred_check
      _
    $region23: #{tpu_custom_call.1} parent=1 // pred_check_branch
      %48 = sbr.rel (0) target = $region25
    $region24: #{tpu_custom_call.1} parent=1 // pred_region
      %49 = dma.done [#allocation3], 256
    $region25: #{tpu_custom_call.1} parent=1 // pred_fallthru
      _
    // Predicated region
    $region26: #{tpu_custom_call.1} parent=1 // pred_check
      _
    $region27: #{tpu_custom_call.1} parent=1 // pred_check_branch
      %51 = sbr.rel (0) target = $region29
    $region28: #{tpu_custom_call.1} parent=1 // pred_region
      %52 = dma.done [#allocation6], 512
    $region29: #{tpu_custom_call.1} parent=1 // pred_fallthru
      _
    %v53 = vld [vmem:[#allocation2] sm:$0xff]
    %v54 = vld [vmem:[#allocation2 + $0x8] sm:$0xff]
    %v55 = vld [vmem:[%s1] sm:$0x3]
    %v56 = vld [vmem:[#allocation5] sm:$0xff]
    %v57 = vld [vmem:[#allocation5 + $0x8] sm:$0xff]
    %v58 = vld [vmem:[#allocation5 + $0x10] sm:$0xff]
    %v59 = vld [vmem:[#allocation5 + $0x18] sm:$0xff]
    %v60 = vld [vmem:[%s3] sm:$0x1]
    %v61 = vld [vmem:[%s4] sm:$0x1]
    %v63 = vlaneseq
    %v64 = vshrl.u32 %v63, 7
    %v65 = vsub.s32 0, %v64
    %v66 = vrot.slane %v60, %v65
    %vm68 = vcmask 261120
    %v70 = vsel %vm68, %v53, 0
    %v73 = vsel %vm68, %v54, 0
    %75 = vmatprep.subr.mxu0 0.0
    %76 = vmatpush1.msra.mxu0 %v56
    %77 = vmatprep.subr.mxu0 0.0
    %78 = vmatpush1.msra.mxu0 %v57
    %79 = vmatprep.subr.mxu0 0.0
    %80 = vmatpush1.msra.mxu0 %v58
    %81 = vmatprep.subr.mxu0 0.0
    %82 = vmatpush1.msra.mxu0 %v59
    %83 = vmatprep.subr.mxu0 0.0
    %84 = vmatpush1.msra.mxu0 0.0
    %85 = vmatprep.subr.mxu0 0.0
    %86 = vmatpush1.msra.mxu0 0.0
    %87 = vmatprep.subr.mxu0 0.0
    %88 = vmatpush1.msra.mxu0 0.0
    %89 = vmatprep.subr.mxu0 0.0
    %90 = vmatpush1.msra.mxu0 0.0
    %91 = vmatprep.subr.mxu0 0.0
    %92 = vmatpush1.msra.mxu0 0.0
    %93 = vmatprep.subr.mxu0 0.0
    %94 = vmatpush1.msra.mxu0 0.0
    %95 = vmatprep.subr.mxu0 0.0
    %96 = vmatpush1.msra.mxu0 0.0
    %97 = vmatprep.subr.mxu0 0.0
    %98 = vmatpush1.msra.mxu0 0.0
    %99 = vmatprep.subr.mxu0 0.0
    %100 = vmatpush1.msra.mxu0 0.0
    %101 = vmatprep.subr.mxu0 0.0
    %102 = vmatpush1.msra.mxu0 0.0
    %103 = vmatprep.subr.mxu0 0.0
    %104 = vmatpush1.msra.mxu0 0.0
    %105 = vmatprep.subr.mxu0 0.0
    %106 = vmatpush1.msra.mxu0 0.0
    %107 = vmatprep.subr.mxu0 0.0
    %108 = vmatpush1.msra.mxu0 0.0
    %109 = vmatprep.subr.mxu0 0.0
    %110 = vmatpush1.msra.mxu0 0.0
    %111 = vmatprep.subr.mxu0 0.0
    %112 = vmatpush1.msra.mxu0 0.0
    %113 = vmatprep.subr.mxu0 0.0
    %114 = vmatpush1.msra.mxu0 0.0
    %115 = vmatprep.subr.mxu0 0.0
    %116 = vmatpush1.msra.mxu0 0.0
    %117 = vmatprep.subr.mxu0 0.0
    %118 = vmatpush1.msra.mxu0 0.0
    %119 = vmatprep.subr.mxu0 0.0
    %120 = vmatpush1.msra.mxu0 0.0
    %121 = vmatprep.subr.mxu0 0.0
    %122 = vmatpush1.msra.mxu0 0.0
    %123 = vmatprep.subr.mxu0 0.0
    %124 = vmatpush1.msra.mxu0 0.0
    %125 = vmatprep.subr.mxu0 0.0
    %126 = vmatpush1.msra.mxu0 0.0
    %127 = vmatprep.subr.mxu0 0.0
    %128 = vmatpush1.msra.mxu0 0.0
    %129 = vmatprep.subr.mxu0 0.0
    %130 = vmatpush1.msra.mxu0 0.0
    %131 = vmatprep.subr.mxu0 0.0
    %132 = vmatpush1.msra.mxu0 0.0
    %133 = vmatprep.subr.mxu0 0.0
    %134 = vmatpush1.msra.mxu0 0.0
    %135 = vmatprep.subr.mxu0 0.0
    %136 = vmatpush1.msra.mxu0 0.0
    %137 = vmatprep.subr.mxu0 0.0
    %138 = vmatpush1.msra.mxu0 0.0
    %139 = vmatprep.mubr.f32.mxu0 0.0
    %140 = vmatmul.mubr.f32.gmra.mrb[0].mxu0 %v70
    %v141 = vpop.f32.mrb[0].mxu0
    %v142 = vadd.f32 %v66, %v141
    %v143 = vpop.f32.mrb[0].mxu0
    %144 = vmatprep.mubr.f32.mxu0 0.0
    %145 = vmatmul.mubr.f32.gmra.mrb[0].mxu0 %v73
    %v146 = vpop.f32.mrb[0].mxu0
    %v147 = vadd.f32 %v66, %v146
    %v148 = vpop.f32.mrb[0].mxu0
    %149 = vdwg.mxu0
    %v150 = vtanh.pop %v142
    %v151 = vtanh.pop %v147
    %v153 = vlaneseq
    %v154 = vshrl.u32 %v153, 7
    %v155 = vsub.s32 0, %v154
    %v156 = vrot.slane %v61, %v155
    %v158 = vmul.f32 %v150, %v156
    %v159 = vmul.f32 %v151, %v156
    %160 = vadd.xlane.f32.xlu0 %v158
    %v161 = vpop.xlane.xlu0 %160
    %162 = vadd.xlane.f32.xlu0 %v159
    %v163 = vpop.xlane.xlu0 %162
    %vm164 = vcmp.gt.f32.partialorder %v55, 0.0
    %v165 = vsel %vm164, -3.4028235e+38, 0.0
    %v167 = vlaneseq
    %v168 = vshrl.u32 %v167, 7
    %v169 = vsub.s32 0, %v168
    %v170 = vrot.slane %v165, %v169
    %172 = vbcast.lane.b32.xlu0 %v170, 256
    %v173 = vpop.permute.xlu0 %172
    %v174 = vlaneseq
    %v175 = vshrl.u32 %v174, 7
    %v176 = vsub.s32 1, %v175
    %v177 = vrot.slane %v165, %v176
    %179 = vbcast.lane.b32.xlu0 %v177, 256
    %v180 = vpop.permute.xlu0 %179
    %v183 = vadd.f32 %v161, %v173
    %v184 = vadd.f32 %v163, %v180
    %187 = vset.pattern.permute.xlu0 0
    %188 = vperm.xlu0 %187, %v183
    %v189 = vpop.permute.xlu0 %188
    %190 = vset.pattern.permute.xlu0 0
    %191 = vperm.xlu0 %190, %v184
    %v192 = vpop.permute.xlu0 %191
    %v193 = vlaneseq
    %v194 = vand.u32 %v193, 127
    %v195 = vlaneseq
    %v196 = vshrl.u32 %v195, 7
    %v197 = vsub.s32 %v194, %v196
    %v198 = vrot.slane %v189, %v197
    %v199 = vlaneseq
    %v200 = vshrl.u32 %v199, 7
    %v201 = vsub.s32 %v194, %v200
    %v202 = vrot.slane %v192, %v201
    %vm203 = vcmask 1041409
    %v204 = vsel %vm203, %v202, %v198
    %vm206 = vcmask 58368
    %v207 = vsel %vm206, %v204, -inf
    %208 = vmax.xlane.f32.xlu0 %v207
    %v209 = vpop.xlane.xlu0 %208
    %v211 = vlaneseq
    %v212 = vshrl.u32 %v211, 7
    %v213 = vsub.s32 0, %v212
    %v214 = vrot.slane %v209, %v213
    %v215 = vlaneseq
    %v216 = vshrl.u32 %v215, 7
    %v217 = vsub.s32 1, %v216
    %v218 = vrot.slane %v209, %v217
    %v221 = vsub.f32 %v183, %v214
    %v222 = vsub.f32 %v184, %v218
    %v223 = vmul.f32 %v221, 1.442695
    %v224 = vpow.pop %v223
    %v225 = vmul.f32 %v222, 1.442695
    %v226 = vpow.pop %v225
    %229 = vset.pattern.permute.xlu0 0
    %230 = vperm.xlu0 %229, %v224
    %v231 = vpop.permute.xlu0 %230
    %232 = vset.pattern.permute.xlu0 0
    %233 = vperm.xlu0 %232, %v226
    %v234 = vpop.permute.xlu0 %233
    %v235 = vlaneseq
    %v236 = vshrl.u32 %v235, 7
    %v237 = vsub.s32 %v194, %v236
    %v238 = vrot.slane %v231, %v237
    %v239 = vlaneseq
    %v240 = vshrl.u32 %v239, 7
    %v241 = vsub.s32 %v194, %v240
    %v242 = vrot.slane %v234, %v241
    %v243 = vsel %vm203, %v242, %v238
    %v245 = vsel %vm206, %v243, 0.0
    %246 = vadd.xlane.f32.xlu0 %v245
    %v247 = vpop.xlane.xlu0 %246
    %v248 = vrcp.pop %v247
    %v250 = vlaneseq
    %v251 = vshrl.u32 %v250, 7
    %v252 = vsub.s32 0, %v251
    %v253 = vrot.slane %v248, %v252
    %v254 = vlaneseq
    %v255 = vshrl.u32 %v254, 7
    %v256 = vsub.s32 1, %v255
    %v257 = vrot.slane %v248, %v256
    %v260 = vmul.f32 %v224, %v253
    %v261 = vmul.f32 %v226, %v257
    %264 = vset.pattern.permute.xlu0 0
    %265 = vperm.xlu0 %264, %v260
    %v266 = vpop.permute.xlu0 %265
    %267 = vset.pattern.permute.xlu0 0
    %268 = vperm.xlu0 %267, %v261
    %v269 = vpop.permute.xlu0 %268
    %v270 = vlaneseq
    %v271 = vshrl.u32 %v270, 7
    %v272 = vsub.s32 %v194, %v271
    %v273 = vrot.slane %v266, %v272
    %v274 = vlaneseq
    %v275 = vshrl.u32 %v274, 7
    %v276 = vsub.s32 %v194, %v275
    %v277 = vrot.slane %v269, %v276
    %v278 = vsel %vm203, %v277, %v273
    %v280 = vsel %vm164, 0.0, %v278
    %281 = vst.msk [vmem:[#allocation10] sm:$0x3] %vm206, %v280
    %v282 = vlaneseq
    %v283 = vshrl.u32 %v282, 7
    %v284 = vsub.s32 0, %v283
    %v285 = vrot.slane %v280, %v284
    %287 = vbcast.lane.b32.xlu0 %v285, 256
    %v288 = vpop.permute.xlu0 %287
    %v289 = vlaneseq
    %v290 = vshrl.u32 %v289, 7
    %v291 = vsub.s32 1, %v290
    %v292 = vrot.slane %v280, %v291
    %294 = vbcast.lane.b32.xlu0 %v292, 256
    %v295 = vpop.permute.xlu0 %294
    %v296 = vmul.f32 %v53, %v288
    %v297 = vmul.f32 %v54, %v295
    %298 = vst.msk [vmem:[#allocation8] sm:$0xff] %vm68, %v296
    %299 = vst.msk [vmem:[#allocation8 + $0x8] sm:$0xff] %vm68, %v297
    %v300 = vsel %vm68, %v296, 0.0
    %v301 = vrot.slane %v300, 4
    %v302 = vadd.f32 %v300, %v301
    %v303 = vrot.slane %v302, 2
    %v304 = vadd.f32 %v302, %v303
    %v305 = vrot.slane %v304, 1
    %v306 = vadd.f32 %v304, %v305
    %v307 = vsel %vm68, %v297, 0.0
    %v308 = vrot.slane %v307, 4
    %v309 = vadd.f32 %v307, %v308
    %v310 = vrot.slane %v309, 2
    %v311 = vadd.f32 %v309, %v310
    %v312 = vrot.slane %v311, 1
    %v313 = vadd.f32 %v311, %v312
    %v316 = vsel %vm203, %v313, %v306
    %vm318 = vcmask 254976
    %319 = vst.msk [vmem:[#allocation7] sm:$0x3] %vm318, %v316
    // Predicated region
    $region30: #{tpu_custom_call.1} parent=1 // pred_check
      _
    $region31: #{tpu_custom_call.1} parent=1 // pred_check_branch
      %321 = sbr.rel (0) target = $region33
    $region32: #{tpu_custom_call.1} parent=1 // pred_region
      %s323 = ssub.s32 32, 32
      %324 = vsyncadd [#allocation4], %s323
      %s326 = sshll.u32 [#allocation7], 4
      %s327 = int_to_ptr.vmem [resolvable:$true] %s326
      %329 = dma.vmem_to_hbm [thread:$0]  %s327, 32, %s5, [#allocation4]
    $region33: #{tpu_custom_call.1} parent=1 // pred_fallthru
      _
    // Predicated region
    $region34: #{tpu_custom_call.1} parent=1 // pred_check
      _
    $region35: #{tpu_custom_call.1} parent=1 // pred_check_branch
      %331 = sbr.rel (0) target = $region37
    $region36: #{tpu_custom_call.1} parent=1 // pred_region
      %s333 = ssub.s32 256, 256
      %334 = vsyncadd [#allocation9], %s333
      %s335 = sshll.u32 [#allocation8], 4
      %s336 = int_to_ptr.vmem [resolvable:$true] %s335
      %341 = dma.vmem_to_hbm [thread:$0]  %s336, 256, %s6, [#allocation9], 128, 128, 8
    $region37: #{tpu_custom_call.1} parent=1 // pred_fallthru
      _
    // Predicated region
    $region38: #{tpu_custom_call.1} parent=1 // pred_check
      _
    $region39: #{tpu_custom_call.1} parent=1 // pred_check_branch
      %343 = sbr.rel (0) target = $region41
    $region40: #{tpu_custom_call.1} parent=1 // pred_region
      %s345 = ssub.s32 32, 32
      %346 = vsyncadd [#allocation9], %s345
      %s348 = sshll.u32 [#allocation10], 4
      %s349 = int_to_ptr.vmem [resolvable:$true] %s348
      %351 = dma.vmem_to_hbm [thread:$0]  %s349, 32, %s7, [#allocation9]
    $region41: #{tpu_custom_call.1} parent=1 // pred_fallthru
      _
    // Predicated region
    $region42: #{tpu_custom_call.1} parent=1 // pred_check
      _
    $region43: #{tpu_custom_call.1} parent=1 // pred_check_branch
      %353 = sbr.rel (0) target = $region45
    $region44: #{tpu_custom_call.1} parent=1 // pred_region
      %354 = dma.done [#allocation4], 32
    $region45: #{tpu_custom_call.1} parent=1 // pred_fallthru
      _
    // Predicated region
    $region46: #{tpu_custom_call.1} parent=1 // pred_check
      _
    $region47: #{tpu_custom_call.1} parent=1 // pred_check_branch
      %356 = sbr.rel (0) target = $region49
    $region48: #{tpu_custom_call.1} parent=1 // pred_region
      %357 = dma.done [#allocation9], 256
    $region49: #{tpu_custom_call.1} parent=1 // pred_fallthru
      _
    // Predicated region
    $region50: #{tpu_custom_call.1} parent=1 // pred_check
      _
    $region51: #{tpu_custom_call.1} parent=1 // pred_check_branch
      %359 = sbr.rel (0) target = $region53
    $region52: #{tpu_custom_call.1} parent=1 // pred_region
      %360 = dma.done [#allocation9], 32
    $region53: #{tpu_custom_call.1} parent=1 // pred_fallthru
      _
    %361 = vsyncpa [#allocation3], 1
    %362 = vsyncpa [#allocation6], 1
    %363 = vsyncpa [#allocation4], 1
    %364 = vsyncpa [#allocation9], 1

</llo_original>
